<compile_context>
chip_gen: v5e
topology: v5e:2x2
jax: 0.10.0
libtpu: 0.0.40
codegen_flags: <defaults>
</compile_context>

<pallas_src>
import jax
import jax.numpy as jnp
from jax.experimental import pallas as pl
from jax.experimental.pallas import tpu as pltpu

LANE = 128      # vreg lane width / MXU alignment
SUBLANE = 8     # f32 sublane count


def _round_up(n: int, m: int) -> int:
    return ((n + m - 1) // m) * m


def fc2_kernel(x_ref, w1_ref, b1_ref, w2_ref, b2_ref, w3_ref, b3_ref, o_ref):
    # fc1 + relu  (f32 accumulation on the MXU; biases added in f32)
    h1 = jnp.dot(x_ref[...], w1_ref[...], preferred_element_type=jnp.float32)
    h1 = jnp.maximum(h1 + b1_ref[...], 0.0)
    # fc2 + relu
    h2 = jnp.dot(h1.astype(w2_ref.dtype), w2_ref[...],
                 preferred_element_type=jnp.float32)
    h2 = jnp.maximum(h2 + b2_ref[...], 0.0)
    # fc_out (lane-dense padded store; wrapper slices valid columns)
    out = jnp.dot(h2.astype(w3_ref.dtype), w3_ref[...],
                  preferred_element_type=jnp.float32)
    o_ref[...] = (out + b3_ref[...]).astype(o_ref.dtype)


def prepare_fc2_params(params, compute_dtype=jnp.float32):
    """One-time parameter prep (call at load time, NOT per forward):
    transpose torch (out, in) weights to (in, out), zero-pad every feature dim
    up to a multiple of 128 lanes, cast weights to compute_dtype (e.g. bf16 on
    v6e/v7x). Biases stay f32 (added after the f32-accumulated matmul)."""
    def pad2(a, rows, cols):
        return jnp.pad(a, ((0, rows - a.shape[0]), (0, cols - a.shape[1])))

    w1 = params["w1"].T  # (in,  h1)
    w2 = params["w2"].T  # (h1,  h2)
    w3 = params["w3"].T  # (h2, out)
    in_f, h1 = w1.shape
    _, h2 = w2.shape
    _, out_f = w3.shape
    in_p, h1_p, h2_p, out_p = (_round_up(d, LANE) for d in (in_f, h1, h2, out_f))

    return {
        "w1": pad2(w1, in_p, h1_p).astype(compute_dtype),
        "w2": pad2(w2, h1_p, h2_p).astype(compute_dtype),
        "w3": pad2(w3, h2_p, out_p).astype(compute_dtype),
        "b1": jnp.pad(params["b1"], (0, h1_p - h1))[None, :].astype(jnp.float32),
        "b2": jnp.pad(params["b2"], (0, h2_p - h2))[None, :].astype(jnp.float32),
        "b3": jnp.pad(params["b3"], (0, out_p - out_f))[None, :].astype(jnp.float32),
        "dims": (in_f, out_f),
        "compute_dtype": compute_dtype,
    }


def fc2_forward(x, prep, *, tile_b=None):
    """x: (B, in_features) f32. prep: output of prepare_fc2_params."""
    B, in_f = x.shape
    assert in_f == prep["dims"][0]
    out_f = prep["dims"][1]
    in_p = prep["w1"].shape[0]
    out_p = prep["w3"].shape[1]
    cdt = prep["compute_dtype"]

    # Sublane-aligned batch tile; big enough to amortize per-grid-step overhead
    # when B grows, and >=2 grid steps at large B shards across v7x TensorCores.
    if tile_b is None:
        tile_b = min(512, _round_up(B, SUBLANE))
    tile_b = _round_up(tile_b, SUBLANE)
    B_pad = _round_up(B, tile_b)

    # Zero-pad batch + feature lanes (padded rows/cols contribute exact zeros).
    xp = jnp.pad(x, ((0, B_pad - B), (0, in_p - in_f))).astype(cdt)

    grid = (B_pad // tile_b,)
    full = lambda a: pl.BlockSpec(a.shape, lambda i: (0, 0))  # resident operand

    out_padded = pl.pallas_call(
        fc2_kernel,
        out_shape=jax.ShapeDtypeStruct((B_pad, out_p), jnp.float32),
        grid_spec=pl.GridSpec(
            grid=grid,
            in_specs=[
                pl.BlockSpec((tile_b, in_p), lambda i: (i, 0)),   # x tile over batch
                full(prep["w1"]), full(prep["b1"]),
                full(prep["w2"]), full(prep["b2"]),
                full(prep["w3"]), full(prep["b3"]),
            ],
            out_specs=pl.BlockSpec((tile_b, out_p), lambda i: (i, 0)),
        ),
        compiler_params=pltpu.CompilerParams(
            dimension_semantics=("parallel",),
        ),
    )(xp, prep["w1"], prep["b1"], prep["w2"], prep["b2"], prep["w3"], prep["b3"])

    return out_padded[:B, :out_f]


def reference_forward(x, params):
    h = jnp.maximum(x @ params["w1"].T + params["b1"], 0.0)
    h = jnp.maximum(h @ params["w2"].T + params["b2"], 0.0)
    return h @ params["w3"].T + params["b3"]


if __name__ == "__main__":
    # Small shapes consistent with the module's forward.
    batch = 8
    in_features = 32
    hidden_dim_1 = 64
    hidden_dim_2 = 48
    out_features = 16

    key = jax.random.PRNGKey(0)
    kx, k1, k2, k3, kb1, kb2, kb3 = jax.random.split(key, 7)

    x = jax.random.normal(kx, (batch, in_features), dtype=jnp.float32)

    # torch Linear convention: weight is (out, in).
    params = {
        "w1": jax.random.normal(k1, (hidden_dim_1, in_features), jnp.float32) * 0.1,
        "b1": jax.random.normal(kb1, (hidden_dim_1,), jnp.float32) * 0.1,
        "w2": jax.random.normal(k2, (hidden_dim_2, hidden_dim_1), jnp.float32) * 0.1,
        "b2": jax.random.normal(kb2, (hidden_dim_2,), jnp.float32) * 0.1,
        "w3": jax.random.normal(k3, (out_features, hidden_dim_2), jnp.float32) * 0.1,
        "b3": jax.random.normal(kb3, (out_features,), jnp.float32) * 0.1,
    }

    ref = reference_forward(x, params)

    # f32 path (tight tolerance).
    prep_f32 = prepare_fc2_params(params, compute_dtype=jnp.float32)
    out_f32 = jax.block_until_ready(fc2_forward(x, prep_f32))
    assert out_f32.shape == (batch, out_features)
    assert jnp.allclose(out_f32, ref, atol=1e-4, rtol=1e-4)

    # bf16 weights/activations path (v6e/v7x MXU fast path; f32 accumulation).
    prep_bf16 = prepare_fc2_params(params, compute_dtype=jnp.bfloat16)
    out_bf16 = jax.block_until_ready(fc2_forward(x, prep_bf16))
    assert out_bf16.shape == (batch, out_features)
    assert jnp.allclose(out_bf16, ref, atol=5e-2, rtol=5e-2)

    print("KERNEL_OK")
</pallas_src>

<mosaic_0001>
module attributes {stable_mosaic.version = 11 : i64} {
  func.func @fc2_kernel(%arg0: i32, %arg1: memref<8x128xf32, #tpu.memory_space<vmem>>, %arg2: memref<128x128xf32, #tpu.memory_space<vmem>>, %arg3: memref<1x128xf32, #tpu.memory_space<vmem>>, %arg4: memref<128x128xf32, #tpu.memory_space<vmem>>, %arg5: memref<1x128xf32, #tpu.memory_space<vmem>>, %arg6: memref<128x128xf32, #tpu.memory_space<vmem>>, %arg7: memref<1x128xf32, #tpu.memory_space<vmem>>, %arg8: memref<8x128xf32, #tpu.memory_space<vmem>>) attributes {dimension_semantics = [#tpu.dimension_semantics<parallel>], iteration_bounds = array<i64: 1>, scalar_prefetch = 0 : i64, scratch_operands = 0 : i64, tpu.core_type = #tpu.core_type<tc>, window_params = [{transform_indices = @transform_0, window_bounds = array<i64: 8, 128>}, {pipeline_mode = #tpu.pipeline_mode<synchronous>, transform_indices = @transform_1, window_bounds = array<i64: 128, 128>}, {pipeline_mode = #tpu.pipeline_mode<synchronous>, transform_indices = @transform_2, window_bounds = array<i64: 1, 128>}, {pipeline_mode = #tpu.pipeline_mode<synchronous>, transform_indices = @transform_3, window_bounds = array<i64: 128, 128>}, {pipeline_mode = #tpu.pipeline_mode<synchronous>, transform_indices = @transform_4, window_bounds = array<i64: 1, 128>}, {pipeline_mode = #tpu.pipeline_mode<synchronous>, transform_indices = @transform_5, window_bounds = array<i64: 128, 128>}, {pipeline_mode = #tpu.pipeline_mode<synchronous>, transform_indices = @transform_6, window_bounds = array<i64: 1, 128>}, {transform_indices = @transform_7, window_bounds = array<i64: 8, 128>}]} {
    %c0 = arith.constant 0 : index
    %c0_0 = arith.constant 0 : index
    %0 = vector.load %arg1[%c0, %c0_0] : memref<8x128xf32, #tpu.memory_space<vmem>>, vector<8x128xf32>
    %c0_1 = arith.constant 0 : index
    %c0_2 = arith.constant 0 : index
    %1 = vector.load %arg2[%c0_1, %c0_2] : memref<128x128xf32, #tpu.memory_space<vmem>>, vector<128x128xf32>
    %cst = arith.constant dense<0.000000e+00> : vector<8x128xf32>
    %2 = tpu.matmul %0, %1, %cst {dimension_numbers = #tpu.dot_dimension_numbers<[1], [0], [0], [1], [0, 0, 1, 1], [], []>} : vector<8x128xf32>, vector<128x128xf32>, vector<8x128xf32> -> vector<8x128xf32>
    %c0_3 = arith.constant 0 : index
    %c0_4 = arith.constant 0 : index
    %3 = vector.load %arg3[%c0_3, %c0_4] : memref<1x128xf32, #tpu.memory_space<vmem>>, vector<1x128xf32>
    %4 = vector.broadcast %3 : vector<1x128xf32> to vector<8x128xf32>
    %5 = arith.addf %2, %4 : vector<8x128xf32>
    %cst_5 = arith.constant 0.000000e+00 : f32
    %6 = vector.broadcast %cst_5 : f32 to vector<8x128xf32>
    %7 = arith.maximumf %5, %6 : vector<8x128xf32>
    %c0_6 = arith.constant 0 : index
    %c0_7 = arith.constant 0 : index
    %8 = vector.load %arg4[%c0_6, %c0_7] : memref<128x128xf32, #tpu.memory_space<vmem>>, vector<128x128xf32>
    %cst_8 = arith.constant dense<0.000000e+00> : vector<8x128xf32>
    %9 = tpu.matmul %7, %8, %cst_8 {dimension_numbers = #tpu.dot_dimension_numbers<[1], [0], [0], [1], [0, 0, 1, 1], [], []>} : vector<8x128xf32>, vector<128x128xf32>, vector<8x128xf32> -> vector<8x128xf32>
    %c0_9 = arith.constant 0 : index
    %c0_10 = arith.constant 0 : index
    %10 = vector.load %arg5[%c0_9, %c0_10] : memref<1x128xf32, #tpu.memory_space<vmem>>, vector<1x128xf32>
    %11 = vector.broadcast %10 : vector<1x128xf32> to vector<8x128xf32>
    %12 = arith.addf %9, %11 : vector<8x128xf32>
    %cst_11 = arith.constant 0.000000e+00 : f32
    %13 = vector.broadcast %cst_11 : f32 to vector<8x128xf32>
    %14 = arith.maximumf %12, %13 : vector<8x128xf32>
    %c0_12 = arith.constant 0 : index
    %c0_13 = arith.constant 0 : index
    %15 = vector.load %arg6[%c0_12, %c0_13] : memref<128x128xf32, #tpu.memory_space<vmem>>, vector<128x128xf32>
    %cst_14 = arith.constant dense<0.000000e+00> : vector<8x128xf32>
    %16 = tpu.matmul %14, %15, %cst_14 {dimension_numbers = #tpu.dot_dimension_numbers<[1], [0], [0], [1], [0, 0, 1, 1], [], []>} : vector<8x128xf32>, vector<128x128xf32>, vector<8x128xf32> -> vector<8x128xf32>
    %c0_15 = arith.constant 0 : index
    %c0_16 = arith.constant 0 : index
    %17 = vector.load %arg7[%c0_15, %c0_16] : memref<1x128xf32, #tpu.memory_space<vmem>>, vector<1x128xf32>
    %18 = vector.broadcast %17 : vector<1x128xf32> to vector<8x128xf32>
    %19 = arith.addf %16, %18 : vector<8x128xf32>
    %c0_17 = arith.constant 0 : index
    %c0_18 = arith.constant 0 : index
    %20 = vector.load %arg8[%c0_17, %c0_18] : memref<8x128xf32, #tpu.memory_space<vmem>>, vector<8x128xf32>
    tpu.vector_store %arg8[%c0_17, %c0_18], %19 {strides = array<i32>} : memref<8x128xf32, #tpu.memory_space<vmem>>, vector<8x128xf32>,
    return
  }
  func.func @transform_0(%arg0: i32) -> (i32, i32) {
    %c0_i32 = arith.constant 0 : i32
    %c0_i32_0 = arith.constant 0 : i32
    return %arg0, %c0_i32 : i32, i32
  }
  func.func @transform_1(%arg0: i32) -> (i32, i32) {
    %c0_i32 = arith.constant 0 : i32
    %c0_i32_0 = arith.constant 0 : i32
    %c0_i32_1 = arith.constant 0 : i32
    return %c0_i32, %c0_i32_0 : i32, i32
  }
  func.func @transform_2(%arg0: i32) -> (i32, i32) {
    %c0_i32 = arith.constant 0 : i32
    %c0_i32_0 = arith.constant 0 : i32
    %c0_i32_1 = arith.constant 0 : i32
    return %c0_i32, %c0_i32_0 : i32, i32
  }
  func.func @transform_3(%arg0: i32) -> (i32, i32) {
    %c0_i32 = arith.constant 0 : i32
    %c0_i32_0 = arith.constant 0 : i32
    %c0_i32_1 = arith.constant 0 : i32
    return %c0_i32, %c0_i32_0 : i32, i32
  }
  func.func @transform_4(%arg0: i32) -> (i32, i32) {
    %c0_i32 = arith.constant 0 : i32
    %c0_i32_0 = arith.constant 0 : i32
    %c0_i32_1 = arith.constant 0 : i32
    return %c0_i32, %c0_i32_0 : i32, i32
  }
  func.func @transform_5(%arg0: i32) -> (i32, i32) {
    %c0_i32 = arith.constant 0 : i32
    %c0_i32_0 = arith.constant 0 : i32
    %c0_i32_1 = arith.constant 0 : i32
    return %c0_i32, %c0_i32_0 : i32, i32
  }
  func.func @transform_6(%arg0: i32) -> (i32, i32) {
    %c0_i32 = arith.constant 0 : i32
    %c0_i32_0 = arith.constant 0 : i32
    %c0_i32_1 = arith.constant 0 : i32
    return %c0_i32, %c0_i32_0 : i32, i32
  }
  func.func @transform_7(%arg0: i32) -> (i32, i32) {
    %c0_i32 = arith.constant 0 : i32
    %c0_i32_0 = arith.constant 0 : i32
    return %arg0, %c0_i32 : i32, i32
  }
}

</mosaic_0001>

<llo_original>
// kernel: tpu_custom_call.1
$region0: #{tpu_custom_call.1}
  #allocation0 [shape = 'u32[]', space=smem, size = 0x4, offset = 0x4, fixed_abs, tag = 'smem constant byte address 0x4 - core index']
  #allocation1 [shape = 'u32[72,128]{1,0:T(1,128)}', space=vmem, size = 0x9000, scoped, tag = 'internal scratch']
  %s0 = inlined_call_operand.hbm [shape: f32[8,128], index: 0, kind: input, shape index: {}]
  %s1 = inlined_call_operand.hbm [shape: f32[128,128], index: 1, kind: input, shape index: {}]
  %s2 = inlined_call_operand.vmem [shape: f32[1,128], index: 2, kind: input, shape index: {}]
  %s3 = inlined_call_operand.hbm [shape: f32[128,128], index: 3, kind: input, shape index: {}]
  %s4 = inlined_call_operand.vmem [shape: f32[1,128], index: 4, kind: input, shape index: {}]
  %s5 = inlined_call_operand.hbm [shape: f32[128,128], index: 5, kind: input, shape index: {}]
  %s6 = inlined_call_operand.vmem [shape: f32[1,128], index: 6, kind: input, shape index: {}]
  %s7 = inlined_call_operand.hbm [shape: f32[8,128], index: 7, kind: output, shape index: {}]
  %s8 = sld [smem:[#allocation0]]
  $region54: #{tpu_custom_call.1} parent=0
    _
  %s10 = ssub.s32 1, %s8
  %s11 = scalar_select 0, %s10, %s8
  $region1: #{tpu_custom_call.1} parent=0
    #allocation2 [shape = 'u8[4096]{0}', space=vmem, size = 0x1000, scoped, tag = 'input window, operand 0, single buffered']
    #allocation3 [shape = 's32[1]{0}', space=sflag, size = 0x4, scoped, tag = 'scoped memory for tpu_custom_call.1']
    #allocation4 [shape = 's32[1]{0}', space=sflag, size = 0x4, scoped, tag = 'scoped memory for tpu_custom_call.1']
    #allocation5 [shape = 'u8[65536]{0}', space=vmem, size = 0x10000, scoped, tag = 'input window, operand 1, single buffered']
    #allocation6 [shape = 's32[1]{0}', space=sflag, size = 0x4, scoped, tag = 'scoped memory for tpu_custom_call.1']
    #allocation7 [shape = 'u8[65536]{0}', space=vmem, size = 0x10000, scoped, tag = 'input window, operand 3, single buffered']
    #allocation8 [shape = 'u8[65536]{0}', space=vmem, size = 0x10000, scoped, tag = 'input window, operand 5, single buffered']
    #allocation9 [shape = 's32[1]{0}', space=sflag, size = 0x4, scoped, tag = 'scoped memory for tpu_custom_call.1']
    #allocation10 [shape = 'u8[4096]{0}', space=vmem, size = 0x1000, scoped, tag = 'output window, operand 0, single buffered']
    %12 = vsyncpa [#allocation3], 0
    %13 = vsyncpa [#allocation6], 0
    %14 = vsyncpa [#allocation9], 0
    %15 = vsyncpa [#allocation4], 0
    // Predicated region
    $region2: #{tpu_custom_call.1} parent=1 // pred_check
      _
    $region3: #{tpu_custom_call.1} parent=1 // pred_check_branch
      %17 = sbr.rel (0) target = $region5
    $region4: #{tpu_custom_call.1} parent=1 // pred_region
      %19 = vsyncadd [#allocation3], 0
      %s21 = sshll.u32 %s0, 4
      %s22 = int_to_ptr.hbm [resolvable:$true] %s21
      %s23 = sshll.u32 [#allocation2], 4
      %s24 = int_to_ptr.vmem [resolvable:$true] %s23
      %26 = dma.hbm_to_vmem [thread:$0]  %s22, 128, %s24, [#allocation3]
    $region5: #{tpu_custom_call.1} parent=1 // pred_fallthru
      _
    // Predicated region
    $region6: #{tpu_custom_call.1} parent=1 // pred_check
      _
    $region7: #{tpu_custom_call.1} parent=1 // pred_check_branch
      %28 = sbr.rel (0) target = $region9
    $region8: #{tpu_custom_call.1} parent=1 // pred_region
      %30 = vsyncadd [#allocation6], 0
      %s31 = sshll.u32 %s1, 4
      %s32 = int_to_ptr.hbm [resolvable:$true] %s31
      %s33 = sshll.u32 [#allocation5], 4
      %s34 = int_to_ptr.vmem [resolvable:$true] %s33
      %39 = dma.hbm_to_vmem [thread:$0]  %s32, 2048, %s34, [#allocation6], 128, 128, 8
    $region9: #{tpu_custom_call.1} parent=1 // pred_fallthru
      _
    // Predicated region
    $region10: #{tpu_custom_call.1} parent=1 // pred_check
      _
    $region11: #{tpu_custom_call.1} parent=1 // pred_check_branch
      %41 = sbr.rel (0) target = $region13
    $region12: #{tpu_custom_call.1} parent=1 // pred_region
      _
    $region13: #{tpu_custom_call.1} parent=1 // pred_fallthru
      _
    // Predicated region
    $region14: #{tpu_custom_call.1} parent=1 // pred_check
      _
    $region15: #{tpu_custom_call.1} parent=1 // pred_check_branch
      %43 = sbr.rel (0) target = $region17
    $region16: #{tpu_custom_call.1} parent=1 // pred_region
      %45 = vsyncadd [#allocation6], 0
      %s46 = sshll.u32 %s3, 4
      %s47 = int_to_ptr.hbm [resolvable:$true] %s46
      %s48 = sshll.u32 [#allocation7], 4
      %s49 = int_to_ptr.vmem [resolvable:$true] %s48
      %54 = dma.hbm_to_vmem [thread:$0]  %s47, 2048, %s49, [#allocation6], 128, 128, 8
    $region17: #{tpu_custom_call.1} parent=1 // pred_fallthru
      _
    // Predicated region
    $region18: #{tpu_custom_call.1} parent=1 // pred_check
      _
    $region19: #{tpu_custom_call.1} parent=1 // pred_check_branch
      %56 = sbr.rel (0) target = $region21
    $region20: #{tpu_custom_call.1} parent=1 // pred_region
      _
    $region21: #{tpu_custom_call.1} parent=1 // pred_fallthru
      _
    // Predicated region
    $region22: #{tpu_custom_call.1} parent=1 // pred_check
      _
    $region23: #{tpu_custom_call.1} parent=1 // pred_check_branch
      %58 = sbr.rel (0) target = $region25
    $region24: #{tpu_custom_call.1} parent=1 // pred_region
      %60 = vsyncadd [#allocation9], 0
      %s61 = sshll.u32 %s5, 4
      %s62 = int_to_ptr.hbm [resolvable:$true] %s61
      %s63 = sshll.u32 [#allocation8], 4
      %s64 = int_to_ptr.vmem [resolvable:$true] %s63
      %69 = dma.hbm_to_vmem [thread:$0]  %s62, 2048, %s64, [#allocation9], 128, 128, 8
    $region25: #{tpu_custom_call.1} parent=1 // pred_fallthru
      _
    // Predicated region
    $region26: #{tpu_custom_call.1} parent=1 // pred_check
      _
    $region27: #{tpu_custom_call.1} parent=1 // pred_check_branch
      %71 = sbr.rel (0) target = $region29
    $region28: #{tpu_custom_call.1} parent=1 // pred_region
      _
    $region29: #{tpu_custom_call.1} parent=1 // pred_fallthru
      _
    // Predicated region
    $region30: #{tpu_custom_call.1} parent=1 // pred_check
      _
    $region31: #{tpu_custom_call.1} parent=1 // pred_check_branch
      %73 = sbr.rel (0) target = $region33
    $region32: #{tpu_custom_call.1} parent=1 // pred_region
      %75 = dma.done [#allocation3], 128
    $region33: #{tpu_custom_call.1} parent=1 // pred_fallthru
      _
    // Predicated region
    $region34: #{tpu_custom_call.1} parent=1 // pred_check
      _
    $region35: #{tpu_custom_call.1} parent=1 // pred_check_branch
      %77 = sbr.rel (0) target = $region37
    $region36: #{tpu_custom_call.1} parent=1 // pred_region
      %79 = dma.done [#allocation6], 2048
    $region37: #{tpu_custom_call.1} parent=1 // pred_fallthru
      _
    // Predicated region
    $region38: #{tpu_custom_call.1} parent=1 // pred_check
      _
    $region39: #{tpu_custom_call.1} parent=1 // pred_check_branch
      %81 = sbr.rel (0) target = $region41
    $region40: #{tpu_custom_call.1} parent=1 // pred_region
      %83 = dma.done [#allocation6], 2048
    $region41: #{tpu_custom_call.1} parent=1 // pred_fallthru
      _
    // Predicated region
    $region42: #{tpu_custom_call.1} parent=1 // pred_check
      _
    $region43: #{tpu_custom_call.1} parent=1 // pred_check_branch
      %85 = sbr.rel (0) target = $region45
    $region44: #{tpu_custom_call.1} parent=1 // pred_region
      %87 = dma.done [#allocation9], 2048
    $region45: #{tpu_custom_call.1} parent=1 // pred_fallthru
      _
    %v88 = vld [vmem:[#allocation2] sm:$0xff]
    %v89 = vld [vmem:[#allocation5] sm:$0xff]
    %v90 = vld [vmem:[#allocation5 + $0x8] sm:$0xff]
    %v91 = vld [vmem:[#allocation5 + $0x10] sm:$0xff]
    %v92 = vld [vmem:[#allocation5 + $0x18] sm:$0xff]
    %v93 = vld [vmem:[#allocation5 + $0x20] sm:$0xff]
    %v94 = vld [vmem:[#allocation5 + $0x28] sm:$0xff]
    %v95 = vld [vmem:[#allocation5 + $0x30] sm:$0xff]
    %v96 = vld [vmem:[#allocation5 + $0x38] sm:$0xff]
    %v97 = vld [vmem:[#allocation5 + $0x40] sm:$0xff]
    %v98 = vld [vmem:[#allocation5 + $0x48] sm:$0xff]
    %v99 = vld [vmem:[#allocation5 + $0x50] sm:$0xff]
    %v100 = vld [vmem:[#allocation5 + $0x58] sm:$0xff]
    %v101 = vld [vmem:[#allocation5 + $0x60] sm:$0xff]
    %v102 = vld [vmem:[#allocation5 + $0x68] sm:$0xff]
    %v103 = vld [vmem:[#allocation5 + $0x70] sm:$0xff]
    %v104 = vld [vmem:[#allocation5 + $0x78] sm:$0xff]
    %v105 = vld [vmem:[%s2] sm:$0x1]
    %v107 = vperm.slane %v105, 0
    %109 = vmatpush.msra.mxu0 %v104
    %110 = vmatpush.msra.mxu0 %v103
    %111 = vmatpush.msra.mxu0 %v102
    %112 = vmatpush.msra.mxu0 %v101
    %113 = vmatpush.msra.mxu0 %v100
    %114 = vmatpush.msra.mxu0 %v99
    %115 = vmatpush.msra.mxu0 %v98
    %116 = vmatpush.msra.mxu0 %v97
    %117 = vmatpush.msra.mxu0 %v96
    %118 = vmatpush.msra.mxu0 %v95
    %119 = vmatpush.msra.mxu0 %v94
    %120 = vmatpush.msra.mxu0 %v93
    %121 = vmatpush.msra.mxu0 %v92
    %122 = vmatpush.msra.mxu0 %v91
    %123 = vmatpush.msra.mxu0 %v90
    %124 = vmatpush.msra.mxu0 %v89
    %125 = vmatmul.f32.gmra.mxu0 %v88
    %v126 = vpop.f32.mrf.mxu0
    %v127 = vadd.f32 %v107, %v126
    %128 = vdwg.mxu0
    %v129 = vmax.f32 %v127, 0.0
    %v130 = vld [vmem:[#allocation7] sm:$0xff]
    %v131 = vld [vmem:[#allocation7 + $0x8] sm:$0xff]
    %v132 = vld [vmem:[#allocation7 + $0x10] sm:$0xff]
    %v133 = vld [vmem:[#allocation7 + $0x18] sm:$0xff]
    %v134 = vld [vmem:[#allocation7 + $0x20] sm:$0xff]
    %v135 = vld [vmem:[#allocation7 + $0x28] sm:$0xff]
    %v136 = vld [vmem:[#allocation7 + $0x30] sm:$0xff]
    %v137 = vld [vmem:[#allocation7 + $0x38] sm:$0xff]
    %v138 = vld [vmem:[#allocation7 + $0x40] sm:$0xff]
    %v139 = vld [vmem:[#allocation7 + $0x48] sm:$0xff]
    %v140 = vld [vmem:[#allocation7 + $0x50] sm:$0xff]
    %v141 = vld [vmem:[#allocation7 + $0x58] sm:$0xff]
    %v142 = vld [vmem:[#allocation7 + $0x60] sm:$0xff]
    %v143 = vld [vmem:[#allocation7 + $0x68] sm:$0xff]
    %v144 = vld [vmem:[#allocation7 + $0x70] sm:$0xff]
    %v145 = vld [vmem:[#allocation7 + $0x78] sm:$0xff]
    %v146 = vld [vmem:[%s4] sm:$0x1]
    %v148 = vperm.slane %v146, 0
    %150 = vmatpush.msra.mxu0 %v145
    %151 = vmatpush.msra.mxu0 %v144
    %152 = vmatpush.msra.mxu0 %v143
    %153 = vmatpush.msra.mxu0 %v142
    %154 = vmatpush.msra.mxu0 %v141
    %155 = vmatpush.msra.mxu0 %v140
    %156 = vmatpush.msra.mxu0 %v139
    %157 = vmatpush.msra.mxu0 %v138
    %158 = vmatpush.msra.mxu0 %v137
    %159 = vmatpush.msra.mxu0 %v136
    %160 = vmatpush.msra.mxu0 %v135
    %161 = vmatpush.msra.mxu0 %v134
    %162 = vmatpush.msra.mxu0 %v133
    %163 = vmatpush.msra.mxu0 %v132
    %164 = vmatpush.msra.mxu0 %v131
    %165 = vmatpush.msra.mxu0 %v130
    %166 = vmatmul.f32.gmra.mxu0 %v129
    %v167 = vpop.f32.mrf.mxu0
    %v168 = vadd.f32 %v148, %v167
    %169 = vdwg.mxu0
    %v170 = vmax.f32 %v168, 0.0
    %v171 = vld [vmem:[#allocation8] sm:$0xff]
    %v172 = vld [vmem:[#allocation8 + $0x8] sm:$0xff]
    %v173 = vld [vmem:[#allocation8 + $0x10] sm:$0xff]
    %v174 = vld [vmem:[#allocation8 + $0x18] sm:$0xff]
    %v175 = vld [vmem:[#allocation8 + $0x20] sm:$0xff]
    %v176 = vld [vmem:[#allocation8 + $0x28] sm:$0xff]
    %v177 = vld [vmem:[#allocation8 + $0x30] sm:$0xff]
    %v178 = vld [vmem:[#allocation8 + $0x38] sm:$0xff]
    %v179 = vld [vmem:[#allocation8 + $0x40] sm:$0xff]
    %v180 = vld [vmem:[#allocation8 + $0x48] sm:$0xff]
    %v181 = vld [vmem:[#allocation8 + $0x50] sm:$0xff]
    %v182 = vld [vmem:[#allocation8 + $0x58] sm:$0xff]
    %v183 = vld [vmem:[#allocation8 + $0x60] sm:$0xff]
    %v184 = vld [vmem:[#allocation8 + $0x68] sm:$0xff]
    %v185 = vld [vmem:[#allocation8 + $0x70] sm:$0xff]
    %v186 = vld [vmem:[#allocation8 + $0x78] sm:$0xff]
    %v187 = vld [vmem:[%s6] sm:$0x1]
    %v189 = vperm.slane %v187, 0
    %191 = vmatpush.msra.mxu0 %v186
    %192 = vmatpush.msra.mxu0 %v185
    %193 = vmatpush.msra.mxu0 %v184
    %194 = vmatpush.msra.mxu0 %v183
    %195 = vmatpush.msra.mxu0 %v182
    %196 = vmatpush.msra.mxu0 %v181
    %197 = vmatpush.msra.mxu0 %v180
    %198 = vmatpush.msra.mxu0 %v179
    %199 = vmatpush.msra.mxu0 %v178
    %200 = vmatpush.msra.mxu0 %v177
    %201 = vmatpush.msra.mxu0 %v176
    %202 = vmatpush.msra.mxu0 %v175
    %203 = vmatpush.msra.mxu0 %v174
    %204 = vmatpush.msra.mxu0 %v173
    %205 = vmatpush.msra.mxu0 %v172
    %206 = vmatpush.msra.mxu0 %v171
    %207 = vmatmul.f32.gmra.mxu0 %v170
    %v208 = vpop.f32.mrf.mxu0
    %v209 = vadd.f32 %v189, %v208
    %210 = vdwg.mxu0
    %211 = vst [vmem:[#allocation10] sm:$0xff] %v209
    // Predicated region
    $region46: #{tpu_custom_call.1} parent=1 // pred_check
      _
    $region47: #{tpu_custom_call.1} parent=1 // pred_check_branch
      %213 = sbr.rel (0) target = $region49
    $region48: #{tpu_custom_call.1} parent=1 // pred_region
      %215 = vsyncadd [#allocation4], 0
      %s217 = sshll.u32 [#allocation10], 4
      %s218 = int_to_ptr.vmem [resolvable:$true] %s217
      %s219 = sshll.u32 %s7, 4
      %s220 = int_to_ptr.hbm [resolvable:$true] %s219
      %222 = dma.vmem_to_hbm [thread:$0]  %s218, 128, %s220, [#allocation4]
    $region49: #{tpu_custom_call.1} parent=1 // pred_fallthru
      _
    // Predicated region
    $region50: #{tpu_custom_call.1} parent=1 // pred_check
      _
    $region51: #{tpu_custom_call.1} parent=1 // pred_check_branch
      %224 = sbr.rel (0) target = $region53
    $region52: #{tpu_custom_call.1} parent=1 // pred_region
      %226 = dma.done [#allocation4], 128
    $region53: #{tpu_custom_call.1} parent=1 // pred_fallthru
      _
    %227 = vsyncpa [#allocation3], 1
    %228 = vsyncpa [#allocation6], 1
    %229 = vsyncpa [#allocation9], 1
    %230 = vsyncpa [#allocation4], 1

</llo_original>
